<compile_context>
chip_gen: v7x
topology: tpu7x:2x2x1
jax: 0.10.0
libtpu: 0.0.40
codegen_flags: <defaults>
</compile_context>

<pallas_src>
import math
from functools import partial

import jax
import jax.numpy as jnp
from jax.experimental import pallas as pl
from jax.experimental.pallas import tpu as pltpu

_EPS = 1e-5  # PyTorch BatchNorm1d default eps


def _batchnorm(h, gamma, beta, axis):
    # training-mode BatchNorm1d: biased batch stats along `axis`, per feature.
    # TODO(synk): running-stat buffers are not tracked (they do not affect the
    # training-mode forward output).
    mu = jnp.mean(h, axis=axis, keepdims=True)
    var = jnp.mean(jnp.square(h - mu), axis=axis, keepdims=True)
    return (h - mu) * jax.lax.rsqrt(var + _EPS) * gamma + beta


def _vmem_limit_bytes():
    try:
        cap = pltpu.get_tpu_info().vmem_capacity_bytes
        return int(max(32 << 20, min(cap - (16 << 20), 100 << 20)))
    except Exception:
        return 48 << 20


# ---------------------------------------------------------------------------
# Kernel 0: adj = relu(a1 + a2 + a3)     (this is also the A_new output)
# ---------------------------------------------------------------------------
def adj_kernel(a1_ref, a2_ref, a3_ref, adj_ref):
    adj_ref[...] = jnp.maximum(a1_ref[...] + a2_ref[...] + a3_ref[...], 0.0)


# ---------------------------------------------------------------------------
# Kernel 1: per-graph GCN / cluster pipeline + fused state^T @ relu(h h^T)
# ---------------------------------------------------------------------------
def per_graph_kernel(x_ref, adj_ref, state_ref,
                     gc1w_ref, gc1b_ref, gc2w_ref, gc2b_ref,
                     bng_ref, bnb_ref,
                     mcgw_ref, mcgb_ref, mcl2w_ref, mcl2b_ref,
                     cbng_ref, cbnb_ref, centw_ref, centb_ref,
                     cs_out, tmask_out, cid_out, hsum_out,
                     sup1_ref,
                     *, num_clusters, k, batch_gc1):
    G, N, F = x_ref.shape

    if batch_gc1:
        # Amortize the shared gc1 weight over all G graphs in one MXU matmul.
        xall = x_ref[...].reshape(G * N, F).astype(jnp.bfloat16)
        sup1_ref[...] = jnp.dot(
            xall, gc1w_ref[...],
            preferred_element_type=jnp.float32).reshape(G, N, -1)

    def body(g, carry):
        adj = adj_ref[g].astype(jnp.bfloat16)                          # (N, N)

        # ---- GCN: two GraphConvolution layers + log_softmax over classes ---
        if batch_gc1:
            sup1 = sup1_ref[g]
        else:
            sup1 = jnp.dot(x_ref[g].astype(jnp.bfloat16), gc1w_ref[...],
                           preferred_element_type=jnp.float32)
        h = jnp.dot(adj, sup1.astype(jnp.bfloat16),
                    preferred_element_type=jnp.float32) + gc1b_ref[...]
        h = jnp.maximum(h, 0.0)
        h = jnp.dot(h.astype(jnp.bfloat16), gc2w_ref[...],
                    preferred_element_type=jnp.float32)
        h = jnp.dot(adj, h.astype(jnp.bfloat16),
                    preferred_element_type=jnp.float32) + gc2b_ref[...]
        m = jnp.max(h, axis=1, keepdims=True)
        h = h - (m + jnp.log(jnp.sum(jnp.exp(h - m), axis=1, keepdims=True)))

        # ---- self.norm : BatchNorm1d(nclass) over this graph's N nodes -----
        # (matches the reference, which calls the BN inside the per-graph loop)
        h = _batchnorm(h, bng_ref[...], bnb_ref[...], axis=0)          # (N, nclass)

        # ---- Mycluster: GraphConvolution -> ReLU -> Linear -> ReLU ---------
        c = jnp.dot(h.astype(jnp.bfloat16), mcgw_ref[...],
                    preferred_element_type=jnp.float32)
        c = jnp.dot(adj, c.astype(jnp.bfloat16),
                    preferred_element_type=jnp.float32) + mcgb_ref[...]
        c = jnp.maximum(c, 0.0)
        c = jnp.dot(c.astype(jnp.bfloat16), mcl2w_ref[...],
                    preferred_element_type=jnp.float32) + mcl2b_ref[...]
        c = jnp.maximum(c, 0.0)                                        # (N, C)

        # ---- clusternorm1 ----
        c = _batchnorm(c, cbng_ref[...], cbnb_ref[...], axis=0)

        # argmax(softmax(c, dim=1), dim=1) == argmax(c, dim=1)  (monotone)
        ids_col = jnp.argmax(c, axis=1, keepdims=True)                 # (N, 1)

        # Centrility: sigmoid(Linear(num_clusters -> 1))
        ss = jax.nn.sigmoid(
            jnp.sum(c * centw_ref[...], axis=1, keepdims=True) + centb_ref[...])

        # per-cluster mean centrality score  (torch: div by clamp_(1) counts)
        lane_c = jax.lax.broadcasted_iota(jnp.int32, (N, num_clusters), 1)
        onehot = (ids_col == lane_c).astype(jnp.float32)               # (N, C)
        counts = jnp.sum(onehot, axis=0, keepdims=True)                # (1, C)
        sums = jnp.sum(ss * onehot, axis=0, keepdims=True)             # (1, C)
        scores = sums / jnp.maximum(counts, 1.0)                       # (1, C)
        cs_out[g] = scores

        # top-k cluster ids
        # TODO(synk): only k == 2 is supported (double argmax == topk(...,2)).
        lane1 = jax.lax.broadcasted_iota(jnp.int32, (1, num_clusters), 1)
        idx1 = jnp.argmax(scores, axis=1, keepdims=True)               # (1, 1)
        masked = jnp.where(lane1 == idx1, -jnp.inf, scores)
        idx2 = jnp.argmax(masked, axis=1, keepdims=True)               # (1, 1)
        lane_k = jax.lax.broadcasted_iota(jnp.int32, (1, k), 1)
        cid_out[g] = jnp.where(lane_k == 0, idx1, idx2).astype(jnp.int32)

        # T_mask, lane-dense: (1,C) indicator x (N,C)^T -> (1,N) on the MXU
        top2 = ((lane1 == idx1) | (lane1 == idx2)).astype(jnp.float32)
        tmask_out[g] = jax.lax.dot_general(
            top2, onehot, (((1,), (1,)), ((), ())),
            preferred_element_type=jnp.float32)                        # (1, N)

        # fused head reduction: state^T @ relu(h h^T)   (s is symmetric)
        h_bf = h.astype(jnp.bfloat16)
        s = jnp.maximum(
            jax.lax.dot_general(h_bf, h_bf, (((1,), (1,)), ((), ())),
                                preferred_element_type=jnp.float32), 0.0)
        hsum_out[g] = jnp.dot(state_ref[g], s,
                              preferred_element_type=jnp.float32)      # (1, N)
        return carry

    jax.lax.fori_loop(0, G, body, 0)


# ---------------------------------------------------------------------------
# Kernel 2: head MLP, tiled over the 4096 reduction with an f32 accumulator
# ---------------------------------------------------------------------------
def head_kernel(h_ref, bn1g_ref, bn1b_ref, w1_ref, b1_ref,
                bn2g_ref, bn2b_ref, w2_ref, b2_ref,
                out_ref, acc_ref, hn_ref):
    j = pl.program_id(0)

    @pl.when(j == 0)
    def _():
        acc_ref[...] = jnp.zeros_like(acc_ref)
        # BatchNorm1d(node_num) + bf16 cast hoisted out of the reduction loop.
        hn_ref[...] = _batchnorm(h_ref[...], bn1g_ref[...], bn1b_ref[...],
                                 axis=0).astype(hn_ref.dtype)

    a = jnp.dot(hn_ref[...], w1_ref[...],
                preferred_element_type=jnp.float32) + b1_ref[...]          # (B, tk)
    a = jnp.maximum(a, 0.0)
    # BatchNorm1d(4096): per-feature stats over the batch -> feature tiling safe.
    a = _batchnorm(a, bn2g_ref[...], bn2b_ref[...], axis=0)
    acc_ref[...] += jnp.dot(a.astype(w2_ref.dtype), w2_ref[...],
                            preferred_element_type=jnp.float32)            # (B, 2N)

    @pl.when(j == pl.num_programs(0) - 1)
    def _():
        out_ref[...] = jax.nn.sigmoid(acc_ref[...] + b2_ref[...])


# ---------------------------------------------------------------------------
# Parameters (matches torch init distributions / shapes)
# ---------------------------------------------------------------------------
def init_params(key, *, node_num, nfeat, nhid, nclass, num_clusters, hidden):
    def u(k, shape, bound):
        return jax.random.uniform(k, shape, jnp.float32, -bound, bound)

    keys = iter(jax.random.split(key, 16))
    p = {}
    s = 1.0 / math.sqrt(nhid)
    p['gc1_w'] = u(next(keys), (nfeat, nhid), s)
    p['gc1_b'] = u(next(keys), (1, nhid), s)
    s = 1.0 / math.sqrt(nclass)
    p['gc2_w'] = u(next(keys), (nhid, nclass), s)
    p['gc2_b'] = u(next(keys), (1, nclass), s)
    p['bn_g'] = jnp.ones((1, nclass), jnp.float32)
    p['bn_b'] = jnp.zeros((1, nclass), jnp.float32)
    s = 1.0 / math.sqrt(hidden)
    p['mc_gc1_w'] = u(next(keys), (nclass, hidden), s)
    p['mc_gc1_b'] = u(next(keys), (1, hidden), s)
    s = 1.0 / math.sqrt(hidden)
    p['mc_mlp2_w'] = u(next(keys), (hidden, num_clusters), s)
    p['mc_mlp2_b'] = u(next(keys), (1, num_clusters), s)
    p['cbn_g'] = jnp.ones((1, num_clusters), jnp.float32)
    p['cbn_b'] = jnp.zeros((1, num_clusters), jnp.float32)
    s = 1.0 / math.sqrt(num_clusters)
    p['cent_w'] = u(next(keys), (1, num_clusters), s)
    p['cent_b'] = u(next(keys), (1, 1), s)
    # head
    p['bn1_g'] = jnp.ones((1, node_num), jnp.float32)
    p['bn1_b'] = jnp.zeros((1, node_num), jnp.float32)
    s = 1.0 / math.sqrt(node_num)
    p['mlp1_w'] = u(next(keys), (node_num, 4096), s)
    p['mlp1_b'] = u(next(keys), (1, 4096), s)
    p['bn2_g'] = jnp.ones((1, 4096), jnp.float32)
    p['bn2_b'] = jnp.zeros((1, 4096), jnp.float32)
    s = 1.0 / math.sqrt(4096)
    p['mlp2_w'] = u(next(keys), (4096, 2 * node_num), s)
    p['mlp2_b'] = u(next(keys), (1, 2 * node_num), s)
    return p


def _choose_graphs_per_step(B, N, F, budget_bytes, max_g=16):
    # Rough f32 per-graph working set (adj block, relu(h h^T), GCN temps).
    per_graph = 4 * (3 * N * N + N * (F + 512))
    g = max(1, min(B, max_g, budget_bytes // max(per_graph, 1)))
    # Keep >= 2 grid steps so the "parallel" batch axis can split across the
    # two v7x TensorCores and the pipeline has something to overlap.
    if B > 1:
        g = max(1, min(g, B // 2))
    while B % g:
        g -= 1
    return int(g)


def _choose_adj_row_tile(rows, ncols, target_bytes=2 << 20):
    # Largest row tile (multiple of 8, dividing `rows`) near ~2 MiB per input.
    target = max(8, target_bytes // (4 * max(ncols, 1)))
    if rows <= target:
        return rows
    best = rows
    for t in range(8, int(target) + 1, 8):
        if rows % t == 0:
            best = t
    return best


# ---------------------------------------------------------------------------
# Forward
# ---------------------------------------------------------------------------
def rumor_detect_forward(params, x, a1, a2, a3, state, *,
                         num_clusters, k=2, graphs_per_step=None, block_k=1024):
    B, N, F = x.shape
    nhid = params['gc1_w'].shape[1]
    hidden4096 = params['mlp1_w'].shape[1]
    vmem_limit = _vmem_limit_bytes()

    G = graphs_per_step or _choose_graphs_per_step(B, N, F, vmem_limit // 3)
    if B % G:
        raise ValueError(f"graphs_per_step={G} must divide batch={B}")
    nb = B // G

    # --- Kernel 0: adjacency, flat lane-dense tiling (also the A_new output) -
    rows = B * N
    row_tile = _choose_adj_row_tile(rows, N)
    blk2 = pl.BlockSpec((row_tile, N), lambda t: (t, 0))
    A_flat = pl.pallas_call(
        adj_kernel,
        out_shape=jax.ShapeDtypeStruct((rows, N), jnp.float32),
        grid_spec=pltpu.PrefetchScalarGridSpec(
            num_scalar_prefetch=0, grid=(rows // row_tile,),
            in_specs=[blk2, blk2, blk2], out_specs=blk2),
        compiler_params=pltpu.CompilerParams(
            dimension_semantics=("parallel",), vmem_limit_bytes=vmem_limit),
    )(a1.reshape(rows, N), a2.reshape(rows, N), a3.reshape(rows, N))
    A_new = A_flat.reshape(B, N, N)

    # --- Kernel 1: per-graph pipeline -----------------------------------------
    weight_names = ['gc1_w', 'gc1_b', 'gc2_w', 'gc2_b', 'bn_g', 'bn_b',
                    'mc_gc1_w', 'mc_gc1_b', 'mc_mlp2_w', 'mc_mlp2_b',
                    'cbn_g', 'cbn_b', 'cent_w', 'cent_b']
    wdict = dict(params)
    # TODO(synk): MXU inputs run in bf16 with f32 accumulation -> small drift
    # vs. the f32 PyTorch reference (validate with a tolerance).
    for n in ('gc1_w', 'gc2_w', 'mc_gc1_w', 'mc_mlp2_w'):
        wdict[n] = params[n].astype(jnp.bfloat16)
    weights = [wdict[n] for n in weight_names]
    w_specs = [pl.BlockSpec(w.shape, lambda t: (0, 0)) for w in weights]

    state_row = jnp.swapaxes(state, 1, 2)            # (B, 1, N) lane-major
    batch_gc1 = (N % 8 == 0)                         # free reshape only then

    grid_spec = pltpu.PrefetchScalarGridSpec(
        num_scalar_prefetch=0,
        grid=(nb,),
        in_specs=[pl.BlockSpec((G, N, F), lambda t: (t, 0, 0)),
                  pl.BlockSpec((G, N, N), lambda t: (t, 0, 0)),
                  pl.BlockSpec((G, 1, N), lambda t: (t, 0, 0))] + w_specs,
        out_specs=[pl.BlockSpec((G, 1, num_clusters), lambda t: (t, 0, 0)),
                   pl.BlockSpec((G, 1, N), lambda t: (t, 0, 0)),
                   pl.BlockSpec((G, 1, k), lambda t: (t, 0, 0)),
                   pl.BlockSpec((G, 1, N), lambda t: (t, 0, 0))],
        scratch_shapes=[pltpu.VMEM((G, N, nhid), jnp.float32)],
    )
    out_shapes = (jax.ShapeDtypeStruct((B, 1, num_clusters), jnp.float32),  # C_s^T
                  jax.ShapeDtypeStruct((B, 1, N), jnp.float32),             # T_mask^T
                  jax.ShapeDtypeStruct((B, 1, k), jnp.int32),               # c_id
                  jax.ShapeDtypeStruct((B, 1, N), jnp.float32))             # st^T@relu(hh^T)

    cs_raw, tmask_raw, cid_raw, hsum_raw = pl.pallas_call(
        partial(per_graph_kernel, num_clusters=num_clusters, k=k,
                batch_gc1=batch_gc1),
        out_shape=out_shapes,
        grid_spec=grid_spec,
        compiler_params=pltpu.CompilerParams(
            dimension_semantics=("parallel",), vmem_limit_bytes=vmem_limit),
    )(x, A_new, state_row, *weights)

    C_s = jnp.swapaxes(cs_raw, 1, 2)        # (B, num_clusters, 1)
    T_mask = jnp.swapaxes(tmask_raw, 1, 2)  # (B, N, 1)
    c_id = cid_raw[:, 0, :]                 # (B, k)
    hsum = hsum_raw[:, 0, :]                # (B, N)

    # --- Kernel 2: head MLP, k-tiled over the 4096 reduction, bf16 weights ---
    w1 = params['mlp1_w'].astype(jnp.bfloat16)
    w2 = params['mlp2_w'].astype(jnp.bfloat16)
    tk = min(block_k, hidden4096)
    assert hidden4096 % tk == 0
    nk = hidden4096 // tk

    out_flat = pl.pallas_call(
        head_kernel,
        out_shape=jax.ShapeDtypeStruct((B, 2 * N), jnp.float32),
        grid_spec=pltpu.PrefetchScalarGridSpec(
            num_scalar_prefetch=0,
            grid=(nk,),
            in_specs=[pl.BlockSpec((B, N), lambda j: (0, 0)),        # hsum
                      pl.BlockSpec((1, N), lambda j: (0, 0)),        # bn1 gamma
                      pl.BlockSpec((1, N), lambda j: (0, 0)),        # bn1 beta
                      pl.BlockSpec((N, tk), lambda j: (0, j)),       # mlp1_w tile
                      pl.BlockSpec((1, tk), lambda j: (0, j)),       # mlp1_b tile
                      pl.BlockSpec((1, tk), lambda j: (0, j)),       # bn2 gamma tile
                      pl.BlockSpec((1, tk), lambda j: (0, j)),       # bn2 beta tile
                      pl.BlockSpec((tk, 2 * N), lambda j: (j, 0)),   # mlp2_w tile
                      pl.BlockSpec((1, 2 * N), lambda j: (0, 0))],   # mlp2_b
            out_specs=pl.BlockSpec((B, 2 * N), lambda j: (0, 0)),
            scratch_shapes=[pltpu.VMEM((B, 2 * N), jnp.float32),
                            pltpu.VMEM((B, N), jnp.bfloat16)]),
        compiler_params=pltpu.CompilerParams(
            dimension_semantics=("arbitrary",), vmem_limit_bytes=vmem_limit),
    )(hsum, params['bn1_g'], params['bn1_b'], w1, params['mlp1_b'],
      params['bn2_g'], params['bn2_b'], w2, params['mlp2_b'])

    output = out_flat.reshape(B, N, 2)      # sigmoid(output.view(-1, node_num, 2))
    return C_s, T_mask, c_id, output, A_new


if __name__ == "__main__":
    B, N, NFEAT, NHID, NCLASS = 2, 16, 8, 32, 16
    NUM_CLUSTERS, HIDDEN, K = 8, 16, 2

    key = jax.random.PRNGKey(0)
    kp, kx, k1, k2, k3, ks = jax.random.split(key, 6)
    params = init_params(kp, node_num=N, nfeat=NFEAT, nhid=NHID,
                         nclass=NCLASS, num_clusters=NUM_CLUSTERS, hidden=HIDDEN)

    x = jax.random.normal(kx, (B, N, NFEAT), jnp.float32)
    a1 = jax.random.normal(k1, (B, N, N), jnp.float32)
    a2 = jax.random.normal(k2, (B, N, N), jnp.float32)
    a3 = jax.random.normal(k3, (B, N, N), jnp.float32)
    state = jax.random.normal(ks, (B, N, 1), jnp.float32)

    C_s, T_mask, c_id, output, A_new = rumor_detect_forward(
        params, x, a1, a2, a3, state, num_clusters=NUM_CLUSTERS, k=K)
    jax.tree_util.tree_map(jax.block_until_ready,
                           (C_s, T_mask, c_id, output, A_new))

    assert C_s.shape == (B, NUM_CLUSTERS, 1)
    assert T_mask.shape == (B, N, 1)
    assert c_id.shape == (B, K)
    assert output.shape == (B, N, 2)
    assert A_new.shape == (B, N, N)
    # exact check of the elementwise adjacency kernel
    assert jnp.allclose(A_new, jnp.maximum(a1 + a2 + a3, 0.0), atol=1e-6)
    assert bool(jnp.all(jnp.isfinite(output)))
    # T_mask entries are 0/1 indicators of membership in the top-2 clusters
    assert bool(jnp.all((T_mask == 0.0) | (T_mask == 1.0)))
    print("KERNEL_OK")
</pallas_src>

<mosaic_0001>
module attributes {stable_mosaic.version = 11 : i64} {
  func.func @adj_kernel(%arg0: i32, %arg1: memref<32x16xf32, #tpu.memory_space<vmem>>, %arg2: memref<32x16xf32, #tpu.memory_space<vmem>>, %arg3: memref<32x16xf32, #tpu.memory_space<vmem>>, %arg4: memref<32x16xf32, #tpu.memory_space<vmem>>) attributes {dimension_semantics = [#tpu.dimension_semantics<parallel>], iteration_bounds = array<i64: 1>, scalar_prefetch = 0 : i64, scratch_operands = 0 : i64, tpu.core_type = #tpu.core_type<tc>, window_params = [{transform_indices = @transform_0, window_bounds = array<i64: 32, 16>}, {transform_indices = @transform_1, window_bounds = array<i64: 32, 16>}, {transform_indices = @transform_2, window_bounds = array<i64: 32, 16>}, {transform_indices = @transform_3, window_bounds = array<i64: 32, 16>}]} {
    %c0 = arith.constant 0 : index
    %c0_0 = arith.constant 0 : index
    %0 = vector.load %arg1[%c0, %c0_0] : memref<32x16xf32, #tpu.memory_space<vmem>>, vector<32x16xf32>
    %c0_1 = arith.constant 0 : index
    %c0_2 = arith.constant 0 : index
    %1 = vector.load %arg2[%c0_1, %c0_2] : memref<32x16xf32, #tpu.memory_space<vmem>>, vector<32x16xf32>
    %2 = arith.addf %0, %1 : vector<32x16xf32>
    %c0_3 = arith.constant 0 : index
    %c0_4 = arith.constant 0 : index
    %3 = vector.load %arg3[%c0_3, %c0_4] : memref<32x16xf32, #tpu.memory_space<vmem>>, vector<32x16xf32>
    %4 = arith.addf %2, %3 : vector<32x16xf32>
    %cst = arith.constant 0.000000e+00 : f32
    %5 = vector.broadcast %cst : f32 to vector<32x16xf32>
    %6 = arith.maximumf %4, %5 : vector<32x16xf32>
    %c0_5 = arith.constant 0 : index
    %c0_6 = arith.constant 0 : index
    %7 = vector.load %arg4[%c0_5, %c0_6] : memref<32x16xf32, #tpu.memory_space<vmem>>, vector<32x16xf32>
    tpu.vector_store %arg4[%c0_5, %c0_6], %6 {strides = array<i32>} : memref<32x16xf32, #tpu.memory_space<vmem>>, vector<32x16xf32>,
    return
  }
  func.func @transform_0(%arg0: i32) -> (i32, i32) {
    %c0_i32 = arith.constant 0 : i32
    %c0_i32_0 = arith.constant 0 : i32
    return %arg0, %c0_i32 : i32, i32
  }
  func.func @transform_1(%arg0: i32) -> (i32, i32) {
    %c0_i32 = arith.constant 0 : i32
    %c0_i32_0 = arith.constant 0 : i32
    return %arg0, %c0_i32 : i32, i32
  }
  func.func @transform_2(%arg0: i32) -> (i32, i32) {
    %c0_i32 = arith.constant 0 : i32
    %c0_i32_0 = arith.constant 0 : i32
    return %arg0, %c0_i32 : i32, i32
  }
  func.func @transform_3(%arg0: i32) -> (i32, i32) {
    %c0_i32 = arith.constant 0 : i32
    %c0_i32_0 = arith.constant 0 : i32
    return %arg0, %c0_i32 : i32, i32
  }
}

</mosaic_0001>

<llo_original>
// kernel: tpu_custom_call.1
$region0: #{tpu_custom_call.1}
  #allocation0 [shape = 'u32[]', space=smem, size = 0x4, offset = 0x4, fixed_abs, tag = 'smem constant byte address 0x4 - core index']
  #allocation1 [shape = 'u32[144,128]{1,0:T(1,128)}', space=vmem, size = 0x12000, scoped, tag = 'internal scratch']
  %s0 = inlined_call_operand.vmem [shape: f32[32,16], index: 0, kind: input, shape index: {}]
  %s1 = inlined_call_operand.vmem [shape: f32[32,16], index: 1, kind: input, shape index: {}]
  %s2 = inlined_call_operand.vmem [shape: f32[32,16], index: 2, kind: input, shape index: {}]
  %s3 = inlined_call_operand.vmem [shape: f32[32,16], index: 3, kind: output, shape index: {}]
  %s4 = sld [smem:[#allocation0]]
  $region22: #{tpu_custom_call.1} parent=0
    _
  %s6 = ssub.s32 1, %s4
  %s7 = scalar_select 0, %s6, %s4
  // Predicated region
  $region2: #{tpu_custom_call.1} parent=0 // pred_check
    _
  $region3: #{tpu_custom_call.1} parent=0 // pred_check_branch
    %9 = sbr.rel (0) target = $region5
  $region4: #{tpu_custom_call.1} parent=0 // pred_region
    _
  $region5: #{tpu_custom_call.1} parent=0 // pred_fallthru
    _
  // Predicated region
  $region6: #{tpu_custom_call.1} parent=0 // pred_check
    _
  $region7: #{tpu_custom_call.1} parent=0 // pred_check_branch
    %11 = sbr.rel (0) target = $region9
  $region8: #{tpu_custom_call.1} parent=0 // pred_region
    _
  $region9: #{tpu_custom_call.1} parent=0 // pred_fallthru
    _
  // Predicated region
  $region10: #{tpu_custom_call.1} parent=0 // pred_check
    _
  $region11: #{tpu_custom_call.1} parent=0 // pred_check_branch
    %13 = sbr.rel (0) target = $region13
  $region12: #{tpu_custom_call.1} parent=0 // pred_region
    _
  $region13: #{tpu_custom_call.1} parent=0 // pred_fallthru
    _
  %v14 = vld [vmem:[%s0] sm:$0xff]
  %v15 = vld [vmem:[%s0 + $0x8] sm:$0xff]
  %v16 = vld [vmem:[%s0 + $0x10] sm:$0xff]
  %v17 = vld [vmem:[%s0 + $0x18] sm:$0xff]
  %v18 = vld [vmem:[%s1] sm:$0xff]
  %v19 = vld [vmem:[%s1 + $0x8] sm:$0xff]
  %v20 = vld [vmem:[%s1 + $0x10] sm:$0xff]
  %v21 = vld [vmem:[%s1 + $0x18] sm:$0xff]
  %v22 = vadd.f32 %v14, %v18
  %v23 = vadd.f32 %v15, %v19
  %v24 = vadd.f32 %v16, %v20
  %v25 = vadd.f32 %v17, %v21
  %v26 = vld [vmem:[%s2] sm:$0xff]
  %v27 = vld [vmem:[%s2 + $0x8] sm:$0xff]
  %v28 = vld [vmem:[%s2 + $0x10] sm:$0xff]
  %v29 = vld [vmem:[%s2 + $0x18] sm:$0xff]
  %v30 = vadd.f32 %v22, %v26
  %v31 = vadd.f32 %v23, %v27
  %v32 = vadd.f32 %v24, %v28
  %v33 = vadd.f32 %v25, %v29
  %v34 = vmax.f32 %v30, 0.0
  %v35 = vmax.f32 %v31, 0.0
  %v36 = vmax.f32 %v32, 0.0
  %v37 = vmax.f32 %v33, 0.0
  %vm38 = vcmask 130048
  %39 = vst.msk [vmem:[%s3] sm:$0xff] %vm38, %v34
  %40 = vst.msk [vmem:[%s3 + $0x8] sm:$0xff] %vm38, %v35
  %41 = vst.msk [vmem:[%s3 + $0x10] sm:$0xff] %vm38, %v36
  %42 = vst.msk [vmem:[%s3 + $0x18] sm:$0xff] %vm38, %v37
  // Predicated region
  $region14: #{tpu_custom_call.1} parent=0 // pred_check
    _
  $region15: #{tpu_custom_call.1} parent=0 // pred_check_branch
    %44 = sbr.rel (0) target = $region17
  $region16: #{tpu_custom_call.1} parent=0 // pred_region
    _
  $region17: #{tpu_custom_call.1} parent=0 // pred_fallthru
    _
  // Predicated region
  $region18: #{tpu_custom_call.1} parent=0 // pred_check
    _
  $region19: #{tpu_custom_call.1} parent=0 // pred_check_branch
    %46 = sbr.rel (0) target = $region21
  $region20: #{tpu_custom_call.1} parent=0 // pred_region
    _
  $region21: #{tpu_custom_call.1} parent=0 // pred_fallthru
    _

</llo_original>
